<compile_context>
chip_gen: v6e
topology: v6e:2x2x1
jax: 0.10.0
libtpu: 0.0.40
codegen_flags: <defaults>
</compile_context>

<pallas_src>
import functools

import jax
import jax.numpy as jnp
from jax.experimental import pallas as pl
from jax.experimental.pallas import tpu as pltpu


def _ffn_kernel(xw_ref, mw_ref, w1_ref, b1_ref, w2_ref, b2_ref, o_ref,
                *, kernel_size, pad_l, t_tile):
    """One (batch, time-tile) grid step.

    xw_ref : (1, 1, W, C_in)   bf16  window = tile + 2*(K-1) halo rows
    mw_ref : (1, 1, W, 1)      f32   mask over the same window
    w1_ref : (K*C_in, C_hid)   bf16  conv_1 weight, im2col layout
    b1_ref : (1, C_hid)        f32
    w2_ref : (K, C_hid, C_out) bf16  conv_2 weight, tap-major
    b2_ref : (1, C_out)        f32
    o_ref  : (1, 1, T_TILE, C_out)
    with W = t_tile + 2*(K-1) and T_h = t_tile + K - 1.
    """
    K = kernel_size
    t_h = t_tile + K - 1

    mask = mw_ref[0, 0]                                    # (W, 1) f32
    xw = xw_ref[0, 0] * mask.astype(jnp.bfloat16)          # (W, C_in) bf16, masked

    # ---- conv_1: single fused im2col contraction on the MXU -----------------
    lhs1 = jnp.concatenate([xw[k:k + t_h, :] for k in range(K)], axis=-1)
    acc1 = jnp.dot(lhs1, w1_ref[...], preferred_element_type=jnp.float32)
    h = jnp.maximum(acc1 + b1_ref[...], 0.0)               # (T_h, C_hid) f32, ReLU
    # TODO(synk): dropout_p == 0.0 (eval) -> dropout is identity, omitted.

    # Fuse mask multiply + bf16 cast into one elementwise pass over the hidden.
    hm = (h * mask[pad_l:pad_l + t_h, :]).astype(jnp.bfloat16)

    # ---- conv_2: per-tap matmuls (depth C_hid already feeds the MXU) --------
    acc2 = jnp.dot(hm[0:t_tile, :], w2_ref[0], preferred_element_type=jnp.float32)
    for k in range(1, K):
        acc2 = acc2 + jnp.dot(hm[k:k + t_tile, :], w2_ref[k],
                              preferred_element_type=jnp.float32)

    y = (acc2 + b2_ref[...]) * mask[2 * pad_l:2 * pad_l + t_tile, :]
    o_ref[0, 0] = y.astype(o_ref.dtype)


def ffn_pallas(x_nct, mask_n1t, w1_t, b1, w2_t, b2, kernel_size, t_tile=256):
    """x_nct: (B, C_in, T) f32, mask_n1t: (B, 1, T) f32.

    w1_t: torch conv_1 weight (C_hid, C_in, K); w2_t: (C_out, C_hid, K).
    Returns (B, C_out, T) f32.
    """
    B, C_in, T = x_nct.shape
    C_hid = w1_t.shape[0]
    C_out = w2_t.shape[0]
    K = kernel_size
    pad_l = (K - 1) // 2          # "same" padding: left = (K-1)//2, right = K//2
    pad_r = K // 2
    halo_l, halo_r = 2 * pad_l, 2 * pad_r   # two stacked convs -> double halo

    # Tile size along T (multiple of 8, clamped for short sequences).
    t_tile = max(8, min(int(t_tile), ((T + 7) // 8) * 8))
    t_tile = ((t_tile + 7) // 8) * 8
    n_tiles = pl.cdiv(T, t_tile)
    t_round = n_tiles * t_tile
    W = t_tile + halo_l + halo_r

    # NCT -> (B, T, C); XLA fuses the transpose + zero-pad + window gather below
    # into a single pass that writes the (small, halo-overlapped) window array.
    x_btc = jnp.transpose(x_nct, (0, 2, 1))                 # (B, T, C_in)
    mask_bt1 = jnp.transpose(mask_n1t, (0, 2, 1))           # (B, T, 1)
    xp = jnp.pad(x_btc, ((0, 0), (halo_l, halo_r + t_round - T), (0, 0)))
    mp = jnp.pad(mask_bt1, ((0, 0), (halo_l, halo_r + t_round - T), (0, 0)))

    # Overlapping windows: tile i covers x rows [i*t_tile - 2*pad_l, i*t_tile + t_tile + 2*pad_r).
    row_idx = jnp.arange(n_tiles)[:, None] * t_tile + jnp.arange(W)[None, :]
    x_win = jnp.take(xp, row_idx, axis=1).astype(jnp.bfloat16)   # (B, n_tiles, W, C_in)
    m_win = jnp.take(mp, row_idx, axis=1)                        # (B, n_tiles, W, 1) f32

    # Weights: conv_1 -> fused im2col layout (K*C_in, C_hid); conv_2 -> tap-major.
    w1_f = jnp.transpose(w1_t, (2, 1, 0)).reshape(K * C_in, C_hid).astype(jnp.bfloat16)
    w2_k = jnp.transpose(w2_t, (2, 1, 0)).astype(jnp.bfloat16)   # (K, C_hid, C_out)
    b1r = b1.reshape(1, C_hid).astype(jnp.float32)
    b2r = b2.reshape(1, C_out).astype(jnp.float32)

    kernel = functools.partial(_ffn_kernel, kernel_size=K, pad_l=pad_l, t_tile=t_tile)

    out_win = pl.pallas_call(
        kernel,
        out_shape=jax.ShapeDtypeStruct((B, n_tiles, t_tile, C_out), x_nct.dtype),
        grid_spec=pltpu.PrefetchScalarGridSpec(
            num_scalar_prefetch=0,
            grid=(B, n_tiles),
            in_specs=[
                pl.BlockSpec((1, 1, W, C_in), lambda b, t: (b, t, 0, 0)),       # x window
                pl.BlockSpec((1, 1, W, 1), lambda b, t: (b, t, 0, 0)),          # mask window
                pl.BlockSpec((K * C_in, C_hid), lambda b, t: (0, 0)),           # w1 (im2col)
                pl.BlockSpec((1, C_hid), lambda b, t: (0, 0)),                  # b1
                pl.BlockSpec((K, C_hid, C_out), lambda b, t: (0, 0, 0)),        # w2
                pl.BlockSpec((1, C_out), lambda b, t: (0, 0)),                  # b2
            ],
            out_specs=pl.BlockSpec((1, 1, t_tile, C_out), lambda b, t: (b, t, 0, 0)),
        ),
        compiler_params=pltpu.CompilerParams(
            dimension_semantics=("parallel", "parallel"),
            vmem_limit_bytes=32 * 1024 * 1024,
        ),
    )(x_win, m_win, w1_f, b1r, w2_k, b2r)

    y_btc = out_win.reshape(B, t_round, C_out)[:, :T, :]
    # TODO(synk): the NCT<->BTC transposes could be removed entirely by keeping
    # model activations channel-last end to end; kept here for drop-in NCT I/O.
    return jnp.transpose(y_btc, (0, 2, 1))


def ffn_reference(x_nct, mask_n1t, w1_t, b1, w2_t, b2, kernel_size):
    """Plain-JAX f32 reference matching the PyTorch forward (same padding, no dropout)."""
    K = kernel_size
    pad_l, pad_r = (K - 1) // 2, K // 2

    def conv1d(x, w, b):  # x: (B, C_in, T), w: (C_out, C_in, K)
        xp = jnp.pad(x, ((0, 0), (0, 0), (pad_l, pad_r)))
        y = jax.lax.conv_general_dilated(
            xp, w, window_strides=(1,), padding="VALID",
            dimension_numbers=("NCH", "OIH", "NCH"))
        return y + b[None, :, None]

    h = jax.nn.relu(conv1d(x_nct * mask_n1t, w1_t, b1))
    y = conv1d(h * mask_n1t, w2_t, b2)
    return y * mask_n1t


if __name__ == "__main__":
    B, C_in, C_hid, C_out, T, K = 2, 8, 32, 8, 40, 3

    key = jax.random.PRNGKey(0)
    k_x, k_w1, k_b1, k_w2, k_b2 = jax.random.split(key, 5)

    x = jax.random.normal(k_x, (B, C_in, T), dtype=jnp.float32)
    # Length mask, shape (B, 1, T): second batch element is shorter.
    lengths = jnp.array([T, T - 7])
    mask = (jnp.arange(T)[None, None, :] < lengths[:, None, None]).astype(jnp.float32)

    # Parameters with torch Conv1d shapes: (out, in, K).
    w1 = jax.random.normal(k_w1, (C_hid, C_in, K), jnp.float32) * 0.1
    b1 = jax.random.normal(k_b1, (C_hid,), jnp.float32) * 0.1
    w2 = jax.random.normal(k_w2, (C_out, C_hid, K), jnp.float32) * 0.1
    b2 = jax.random.normal(k_b2, (C_out,), jnp.float32) * 0.1

    # t_tile=16 with T=40 exercises multiple time tiles, the halo exchange across
    # tile boundaries, and the padded right edge (T not a multiple of the tile).
    y = ffn_pallas(x, mask, w1, b1, w2, b2, K, t_tile=16)
    y = jax.block_until_ready(y)

    y_ref = ffn_reference(x, mask, w1, b1, w2, b2, K)
    assert y.shape == (B, C_out, T), y.shape
    max_err = float(jnp.max(jnp.abs(y - y_ref)))
    # bf16 MXU operands with f32 accumulation vs the f32 reference -> loose tol.
    assert jnp.allclose(y, y_ref, atol=5e-2, rtol=5e-2), max_err
    print("KERNEL_OK")
</pallas_src>

<mosaic_0001>
module attributes {stable_mosaic.version = 11 : i64} {
  func.func @_ffn_kernel(%arg0: i32, %arg1: i32, %arg2: memref<1x1x20x8xbf16, #tpu.memory_space<vmem>>, %arg3: memref<1x1x20x1xf32, #tpu.memory_space<vmem>>, %arg4: memref<24x32xbf16, #tpu.memory_space<vmem>>, %arg5: memref<1x32xf32, #tpu.memory_space<vmem>>, %arg6: memref<3x32x8xbf16, #tpu.memory_space<vmem>>, %arg7: memref<1x8xf32, #tpu.memory_space<vmem>>, %arg8: memref<1x1x16x8xf32, #tpu.memory_space<vmem>>) attributes {dimension_semantics = [#tpu.dimension_semantics<parallel>, #tpu.dimension_semantics<parallel>], iteration_bounds = array<i64: 2, 3>, scalar_prefetch = 0 : i64, scratch_operands = 0 : i64, tpu.core_type = #tpu.core_type<tc>, window_params = [{transform_indices = @transform_0, window_bounds = array<i64: 1, 1, 20, 8>}, {transform_indices = @transform_1, window_bounds = array<i64: 1, 1, 20, 1>}, {pipeline_mode = #tpu.pipeline_mode<synchronous>, transform_indices = @transform_2, window_bounds = array<i64: 24, 32>}, {pipeline_mode = #tpu.pipeline_mode<synchronous>, transform_indices = @transform_3, window_bounds = array<i64: 1, 32>}, {pipeline_mode = #tpu.pipeline_mode<synchronous>, transform_indices = @transform_4, window_bounds = array<i64: 3, 32, 8>}, {pipeline_mode = #tpu.pipeline_mode<synchronous>, transform_indices = @transform_5, window_bounds = array<i64: 1, 8>}, {transform_indices = @transform_6, window_bounds = array<i64: 1, 1, 16, 8>}]} {
    %c0 = arith.constant 0 : index
    %c0_0 = arith.constant 0 : index
    %c0_1 = arith.constant 0 : index
    %c0_2 = arith.constant 0 : index
    %0 = vector.load %arg3[%c0, %c0_0, %c0_1, %c0_2] : memref<1x1x20x1xf32, #tpu.memory_space<vmem>>, vector<1x1x20x1xf32>
    %1 = vector.shape_cast %0 : vector<1x1x20x1xf32> to vector<20x1xf32>
    %c0_3 = arith.constant 0 : index
    %c0_4 = arith.constant 0 : index
    %c0_5 = arith.constant 0 : index
    %c0_6 = arith.constant 0 : index
    %2 = vector.load %arg2[%c0_3, %c0_4, %c0_5, %c0_6] : memref<1x1x20x8xbf16, #tpu.memory_space<vmem>>, vector<1x1x20x8xbf16>
    %3 = vector.shape_cast %2 : vector<1x1x20x8xbf16> to vector<20x8xbf16>
    %4 = arith.truncf %1 : vector<20x1xf32> to vector<20x1xbf16>
    %5 = vector.broadcast %4 : vector<20x1xbf16> to vector<20x8xbf16>
    %6 = arith.mulf %3, %5 : vector<20x8xbf16>
    %7 = vector.extract_strided_slice %6 {offsets = [0, 0], sizes = [18, 8], strides = [1, 1]} : vector<20x8xbf16> to vector<18x8xbf16>
    %8 = vector.extract_strided_slice %6 {offsets = [1, 0], sizes = [18, 8], strides = [1, 1]} : vector<20x8xbf16> to vector<18x8xbf16>
    %9 = vector.extract_strided_slice %6 {offsets = [2, 0], sizes = [18, 8], strides = [1, 1]} : vector<20x8xbf16> to vector<18x8xbf16>
    %10 = tpu.concatenate %7, %8, %9 in 1 : vector<18x8xbf16>, vector<18x8xbf16>, vector<18x8xbf16> -> vector<18x24xbf16>
    %c0_7 = arith.constant 0 : index
    %c0_8 = arith.constant 0 : index
    %11 = vector.load %arg4[%c0_7, %c0_8] : memref<24x32xbf16, #tpu.memory_space<vmem>>, vector<24x32xbf16>
    %cst = arith.constant dense<0.000000e+00> : vector<18x32xf32>
    %12 = tpu.matmul %10, %11, %cst {dimension_numbers = #tpu.dot_dimension_numbers<[1], [0], [0], [1], [0, 0, 1, 1], [], []>} : vector<18x24xbf16>, vector<24x32xbf16>, vector<18x32xf32> -> vector<18x32xf32>
    %c0_9 = arith.constant 0 : index
    %c0_10 = arith.constant 0 : index
    %13 = vector.load %arg5[%c0_9, %c0_10] : memref<1x32xf32, #tpu.memory_space<vmem>>, vector<1x32xf32>
    %14 = vector.broadcast %13 : vector<1x32xf32> to vector<18x32xf32>
    %15 = arith.addf %12, %14 : vector<18x32xf32>
    %cst_11 = arith.constant 0.000000e+00 : f32
    %16 = vector.broadcast %cst_11 : f32 to vector<18x32xf32>
    %17 = arith.maximumf %15, %16 : vector<18x32xf32>
    %18 = vector.extract_strided_slice %1 {offsets = [1, 0], sizes = [18, 1], strides = [1, 1]} : vector<20x1xf32> to vector<18x1xf32>
    %19 = vector.broadcast %18 : vector<18x1xf32> to vector<18x32xf32>
    %20 = arith.mulf %17, %19 : vector<18x32xf32>
    %21 = arith.truncf %20 : vector<18x32xf32> to vector<18x32xbf16>
    %22 = vector.extract_strided_slice %21 {offsets = [0, 0], sizes = [16, 32], strides = [1, 1]} : vector<18x32xbf16> to vector<16x32xbf16>
    %c0_12 = arith.constant 0 : index
    %c0_13 = arith.constant 0 : index
    %c0_14 = arith.constant 0 : index
    %23 = vector.load %arg6[%c0_12, %c0_13, %c0_14] : memref<3x32x8xbf16, #tpu.memory_space<vmem>>, vector<1x32x8xbf16>
    %24 = vector.shape_cast %23 : vector<1x32x8xbf16> to vector<32x8xbf16>
    %cst_15 = arith.constant dense<0.000000e+00> : vector<16x8xf32>
    %25 = tpu.matmul %22, %24, %cst_15 {dimension_numbers = #tpu.dot_dimension_numbers<[1], [0], [0], [1], [0, 0, 1, 1], [], []>} : vector<16x32xbf16>, vector<32x8xbf16>, vector<16x8xf32> -> vector<16x8xf32>
    %26 = vector.extract_strided_slice %21 {offsets = [1, 0], sizes = [16, 32], strides = [1, 1]} : vector<18x32xbf16> to vector<16x32xbf16>
    %c1 = arith.constant 1 : index
    %c0_16 = arith.constant 0 : index
    %c0_17 = arith.constant 0 : index
    %27 = vector.load %arg6[%c1, %c0_16, %c0_17] : memref<3x32x8xbf16, #tpu.memory_space<vmem>>, vector<1x32x8xbf16>
    %28 = vector.shape_cast %27 : vector<1x32x8xbf16> to vector<32x8xbf16>
    %cst_18 = arith.constant dense<0.000000e+00> : vector<16x8xf32>
    %29 = tpu.matmul %26, %28, %cst_18 {dimension_numbers = #tpu.dot_dimension_numbers<[1], [0], [0], [1], [0, 0, 1, 1], [], []>} : vector<16x32xbf16>, vector<32x8xbf16>, vector<16x8xf32> -> vector<16x8xf32>
    %30 = arith.addf %25, %29 : vector<16x8xf32>
    %31 = vector.extract_strided_slice %21 {offsets = [2, 0], sizes = [16, 32], strides = [1, 1]} : vector<18x32xbf16> to vector<16x32xbf16>
    %c2 = arith.constant 2 : index
    %c0_19 = arith.constant 0 : index
    %c0_20 = arith.constant 0 : index
    %32 = vector.load %arg6[%c2, %c0_19, %c0_20] : memref<3x32x8xbf16, #tpu.memory_space<vmem>>, vector<1x32x8xbf16>
    %33 = vector.shape_cast %32 : vector<1x32x8xbf16> to vector<32x8xbf16>
    %cst_21 = arith.constant dense<0.000000e+00> : vector<16x8xf32>
    %34 = tpu.matmul %31, %33, %cst_21 {dimension_numbers = #tpu.dot_dimension_numbers<[1], [0], [0], [1], [0, 0, 1, 1], [], []>} : vector<16x32xbf16>, vector<32x8xbf16>, vector<16x8xf32> -> vector<16x8xf32>
    %35 = arith.addf %30, %34 : vector<16x8xf32>
    %c0_22 = arith.constant 0 : index
    %c0_23 = arith.constant 0 : index
    %36 = vector.load %arg7[%c0_22, %c0_23] : memref<1x8xf32, #tpu.memory_space<vmem>>, vector<1x8xf32>
    %37 = vector.broadcast %36 : vector<1x8xf32> to vector<16x8xf32>
    %38 = arith.addf %35, %37 : vector<16x8xf32>
    %39 = vector.extract_strided_slice %1 {offsets = [2, 0], sizes = [16, 1], strides = [1, 1]} : vector<20x1xf32> to vector<16x1xf32>
    %40 = vector.broadcast %39 : vector<16x1xf32> to vector<16x8xf32>
    %41 = arith.mulf %38, %40 : vector<16x8xf32>
    %c0_24 = arith.constant 0 : index
    %c0_25 = arith.constant 0 : index
    %c0_26 = arith.constant 0 : index
    %c0_27 = arith.constant 0 : index
    %42 = vector.load %arg8[%c0_24, %c0_25, %c0_26, %c0_27] : memref<1x1x16x8xf32, #tpu.memory_space<vmem>>, vector<1x1x16x8xf32>
    %43 = vector.shape_cast %42 : vector<1x1x16x8xf32> to vector<16x8xf32>
    %44 = vector.shape_cast %41 : vector<16x8xf32> to vector<1x1x16x8xf32>
    tpu.vector_store %arg8[%c0_24, %c0_25, %c0_26, %c0_27], %44 {strides = array<i32>} : memref<1x1x16x8xf32, #tpu.memory_space<vmem>>, vector<1x1x16x8xf32>,
    return
  }
  func.func @transform_0(%arg0: i32, %arg1: i32) -> (i32, i32, i32, i32) {
    %c0_i32 = arith.constant 0 : i32
    %c0_i32_0 = arith.constant 0 : i32
    %c0_i32_1 = arith.constant 0 : i32
    return %arg0, %arg1, %c0_i32, %c0_i32_0 : i32, i32, i32, i32
  }
  func.func @transform_1(%arg0: i32, %arg1: i32) -> (i32, i32, i32, i32) {
    %c0_i32 = arith.constant 0 : i32
    %c0_i32_0 = arith.constant 0 : i32
    %c0_i32_1 = arith.constant 0 : i32
    return %arg0, %arg1, %c0_i32, %c0_i32_0 : i32, i32, i32, i32
  }
  func.func @transform_2(%arg0: i32, %arg1: i32) -> (i32, i32) {
    %c0_i32 = arith.constant 0 : i32
    %c0_i32_0 = arith.constant 0 : i32
    %c0_i32_1 = arith.constant 0 : i32
    return %c0_i32, %c0_i32_0 : i32, i32
  }
  func.func @transform_3(%arg0: i32, %arg1: i32) -> (i32, i32) {
    %c0_i32 = arith.constant 0 : i32
    %c0_i32_0 = arith.constant 0 : i32
    %c0_i32_1 = arith.constant 0 : i32
    return %c0_i32, %c0_i32_0 : i32, i32
  }
  func.func @transform_4(%arg0: i32, %arg1: i32) -> (i32, i32, i32) {
    %c0_i32 = arith.constant 0 : i32
    %c0_i32_0 = arith.constant 0 : i32
    %c0_i32_1 = arith.constant 0 : i32
    %c0_i32_2 = arith.constant 0 : i32
    return %c0_i32, %c0_i32_0, %c0_i32_1 : i32, i32, i32
  }
  func.func @transform_5(%arg0: i32, %arg1: i32) -> (i32, i32) {
    %c0_i32 = arith.constant 0 : i32
    %c0_i32_0 = arith.constant 0 : i32
    %c0_i32_1 = arith.constant 0 : i32
    return %c0_i32, %c0_i32_0 : i32, i32
  }
  func.func @transform_6(%arg0: i32, %arg1: i32) -> (i32, i32, i32, i32) {
    %c0_i32 = arith.constant 0 : i32
    %c0_i32_0 = arith.constant 0 : i32
    %c0_i32_1 = arith.constant 0 : i32
    return %arg0, %arg1, %c0_i32, %c0_i32_0 : i32, i32, i32, i32
  }
}

</mosaic_0001>

<llo_original>
// kernel: tpu_custom_call.1
$region0: #{tpu_custom_call.1}
  #allocation0 [shape = 'u32[]', space=smem, size = 0x4, offset = 0x4, fixed_abs, tag = 'smem constant byte address 0x4 - core index']
  #allocation1 [shape = 'u32[144,128]{1,0:T(1,128)}', space=vmem, size = 0x12000, scoped, tag = 'internal scratch']
  %s0 = inlined_call_operand.vmem [shape: bf16[2,3,20,8], index: 0, kind: input, shape index: {}]
  %s1 = inlined_call_operand.vmem [shape: f32[2,3,20,1], index: 1, kind: input, shape index: {}]
  %s2 = inlined_call_operand.vmem [shape: bf16[24,32], index: 2, kind: input, shape index: {}]
  %s3 = inlined_call_operand.vmem [shape: f32[1,32], index: 3, kind: input, shape index: {}]
  %s4 = inlined_call_operand.vmem [shape: bf16[3,32,8], index: 4, kind: input, shape index: {}]
  %s5 = inlined_call_operand.vmem [shape: f32[1,8], index: 5, kind: input, shape index: {}]
  %s6 = inlined_call_operand.vmem [shape: f32[2,3,16,8], index: 6, kind: output, shape index: {}]
  %s7 = sld [smem:[#allocation0]]
  $region57: #{tpu_custom_call.1} parent=0
    _
  %s9 = ssub.s32 1, %s7
  %s10 = scalar_select 0, %s9, %s7
  loop: start=0, step=1, limit=8
  $region2: #{tpu_custom_call.1} parent=0 // loop_pre_header
    _
  $region3: #{tpu_custom_call.1} parent=0 // loop_header
    %s12 = sphi 0, %s16
    %p13 = scmp.ge.s32.totalorder %s12, 8
    %s19 = sphi 0, %s31
    %s20 = sphi 0, %s27
    %s21 = sphi 0, %s19
    %s22 = sphi 0, %s20
    %s23 = sphi 0, %s21
    %s24 = sphi 0, %s22
    %s36 = sphi 0, %s38
    %s39 = sphi 0, %s36
    %s40 = sphi 0, %s39
    %s56 = sphi 0, %s40
    %s64 = sphi 0, %s66
    %s67 = sphi 0, %s64
    %s68 = sphi 0, %s67
    %s84 = sphi 0, %s68
    %s88 = sphi 0, %s88
    %s90 = sphi 0, %s88
    %s91 = sphi 0, %s90
    %s105 = sphi 0, %s91
    %s109 = sphi 0, %s109
    %s111 = sphi 0, %s109
    %s112 = sphi 0, %s111
    %s126 = sphi 0, %s112
    %s130 = sphi 0, %s130
    %s132 = sphi 0, %s130
    %s133 = sphi 0, %s132
    %s147 = sphi 0, %s133
    %s151 = sphi 0, %s151
    %s153 = sphi 0, %s151
    %s154 = sphi 0, %s153
    %s168 = sphi 0, %s154
    %s176 = sphi 0, %s178
    %s179 = sphi 0, %s176
    %s180 = sphi 0, %s179
    %s196 = sphi 0, %s180
  $region4: #{tpu_custom_call.1} parent=0 // loop_header_branch
    %15 = sbr.rel (%p13) target = $region8
  $region5: #{tpu_custom_call.1} parent=0 // loop_body
    %s17 = ssub.s32 %s12, 1
    %s18 = ssub.s32 %s12, 2
    %s25 = sadd.s32 1, %s20
    %p26 = scmp.ge.s32.totalorder %s25, 3
    %s27 = scalar_select %p26, 0, %s25
    %s28 = sadd.s32 1, %s19
    %s29 = scalar_select %p26, %s28, %s19
    %p30 = scmp.ge.s32.totalorder %s29, 2
    %s31 = scalar_select %p30, 0, %s29
    %s32 = ssub.s32 %s19, %s31
    %s33 = ssub.s32 %s20, %s27
    %s34 = sor.u32 %s32, %s33
    %p35 = scmp.eq.s32.totalorder %s34, 0
    %s37 = sadd.s32 %s36, 1
    %s38 = scalar_select %p35, %s36, %s37
    %p41 = pneg %p35
    %p42 = scmp.eq.s32.totalorder %s12, 5
    %p43 = por %p41, %p42
    %p44 = scmp.ne.s32.totalorder %s36, %s39
    %p45 = scmp.eq.s32.totalorder %s12, 0
    %p46 = por %p44, %p45
    %p47 = scmp.ne.s32.totalorder %s36, %s39
    %p48 = scmp.eq.s32.totalorder %s17, 5
    %p49 = por %p47, %p48
    %p50 = scmp.ne.s32.totalorder %s39, %s40
    %p51 = scmp.eq.s32.totalorder %s17, 0
    %p52 = por %p50, %p51
    %p53 = scmp.ne.s32.totalorder %s39, %s40
    %p54 = scmp.eq.s32.totalorder %s18, 5
    %p55 = por %p53, %p54
    %p57 = scmp.ne.s32.totalorder %s40, %s56
    %p58 = scmp.eq.s32.totalorder %s18, 0
    %p59 = por %p57, %p58
    %s60 = ssub.s32 %s19, %s31
    %s61 = ssub.s32 %s20, %s27
    %s62 = sor.u32 %s60, %s61
    %p63 = scmp.eq.s32.totalorder %s62, 0
    %s65 = sadd.s32 %s64, 1
    %s66 = scalar_select %p63, %s64, %s65
    %p69 = pneg %p63
    %p70 = scmp.eq.s32.totalorder %s12, 5
    %p71 = por %p69, %p70
    %p72 = scmp.ne.s32.totalorder %s64, %s67
    %p73 = scmp.eq.s32.totalorder %s12, 0
    %p74 = por %p72, %p73
    %p75 = scmp.ne.s32.totalorder %s64, %s67
    %p76 = scmp.eq.s32.totalorder %s17, 5
    %p77 = por %p75, %p76
    %p78 = scmp.ne.s32.totalorder %s67, %s68
    %p79 = scmp.eq.s32.totalorder %s17, 0
    %p80 = por %p78, %p79
    %p81 = scmp.ne.s32.totalorder %s67, %s68
    %p82 = scmp.eq.s32.totalorder %s18, 5
    %p83 = por %p81, %p82
    %p85 = scmp.ne.s32.totalorder %s68, %s84
    %p86 = scmp.eq.s32.totalorder %s18, 0
    %p87 = por %p85, %p86
    %s89 = sadd.s32 %s88, 1
    %p92 = scmp.eq.s32.totalorder %s12, 5
    %p93 = scmp.ne.s32.totalorder %s88, %s90
    %p94 = scmp.eq.s32.totalorder %s12, 0
    %p95 = por %p93, %p94
    %p96 = scmp.ne.s32.totalorder %s88, %s90
    %p97 = scmp.eq.s32.totalorder %s17, 5
    %p98 = por %p96, %p97
    %p99 = scmp.ne.s32.totalorder %s90, %s91
    %p100 = scmp.eq.s32.totalorder %s17, 0
    %p101 = por %p99, %p100
    %p102 = scmp.ne.s32.totalorder %s90, %s91
    %p103 = scmp.eq.s32.totalorder %s18, 5
    %p104 = por %p102, %p103
    %p106 = scmp.ne.s32.totalorder %s91, %s105
    %p107 = scmp.eq.s32.totalorder %s18, 0
    %p108 = por %p106, %p107
    %s110 = sadd.s32 %s109, 1
    %p113 = scmp.eq.s32.totalorder %s12, 5
    %p114 = scmp.ne.s32.totalorder %s109, %s111
    %p115 = scmp.eq.s32.totalorder %s12, 0
    %p116 = por %p114, %p115
    %p117 = scmp.ne.s32.totalorder %s109, %s111
    %p118 = scmp.eq.s32.totalorder %s17, 5
    %p119 = por %p117, %p118
    %p120 = scmp.ne.s32.totalorder %s111, %s112
    %p121 = scmp.eq.s32.totalorder %s17, 0
    %p122 = por %p120, %p121
    %p123 = scmp.ne.s32.totalorder %s111, %s112
    %p124 = scmp.eq.s32.totalorder %s18, 5
    %p125 = por %p123, %p124
    %p127 = scmp.ne.s32.totalorder %s112, %s126
    %p128 = scmp.eq.s32.totalorder %s18, 0
    %p129 = por %p127, %p128
    %s131 = sadd.s32 %s130, 1
    %p134 = scmp.eq.s32.totalorder %s12, 5
    %p135 = scmp.ne.s32.totalorder %s130, %s132
    %p136 = scmp.eq.s32.totalorder %s12, 0
    %p137 = por %p135, %p136
    %p138 = scmp.ne.s32.totalorder %s130, %s132
    %p139 = scmp.eq.s32.totalorder %s17, 5
    %p140 = por %p138, %p139
    %p141 = scmp.ne.s32.totalorder %s132, %s133
    %p142 = scmp.eq.s32.totalorder %s17, 0
    %p143 = por %p141, %p142
    %p144 = scmp.ne.s32.totalorder %s132, %s133
    %p145 = scmp.eq.s32.totalorder %s18, 5
    %p146 = por %p144, %p145
    %p148 = scmp.ne.s32.totalorder %s133, %s147
    %p149 = scmp.eq.s32.totalorder %s18, 0
    %p150 = por %p148, %p149
    %s152 = sadd.s32 %s151, 1
    %p155 = scmp.eq.s32.totalorder %s12, 5
    %p156 = scmp.ne.s32.totalorder %s151, %s153
    %p157 = scmp.eq.s32.totalorder %s12, 0
    %p158 = por %p156, %p157
    %p159 = scmp.ne.s32.totalorder %s151, %s153
    %p160 = scmp.eq.s32.totalorder %s17, 5
    %p161 = por %p159, %p160
    %p162 = scmp.ne.s32.totalorder %s153, %s154
    %p163 = scmp.eq.s32.totalorder %s17, 0
    %p164 = por %p162, %p163
    %p165 = scmp.ne.s32.totalorder %s153, %s154
    %p166 = scmp.eq.s32.totalorder %s18, 5
    %p167 = por %p165, %p166
    %p169 = scmp.ne.s32.totalorder %s154, %s168
    %p170 = scmp.eq.s32.totalorder %s18, 0
    %p171 = por %p169, %p170
    %s172 = ssub.s32 %s19, %s31
    %s173 = ssub.s32 %s20, %s27
    %s174 = sor.u32 %s172, %s173
    %p175 = scmp.eq.s32.totalorder %s174, 0
    %s177 = sadd.s32 %s176, 1
    %s178 = scalar_select %p175, %s176, %s177
    %p181 = pneg %p175
    %p182 = scmp.eq.s32.totalorder %s12, 5
    %p183 = por %p181, %p182
    %p184 = scmp.ne.s32.totalorder %s176, %s179
    %p185 = scmp.eq.s32.totalorder %s12, 0
    %p186 = por %p184, %p185
    %p187 = scmp.ne.s32.totalorder %s176, %s179
    %p188 = scmp.eq.s32.totalorder %s17, 5
    %p189 = por %p187, %p188
    %p190 = scmp.ne.s32.totalorder %s179, %s180
    %p191 = scmp.eq.s32.totalorder %s17, 0
    %p192 = por %p190, %p191
    %p193 = scmp.ne.s32.totalorder %s179, %s180
    %p194 = scmp.eq.s32.totalorder %s18, 5
    %p195 = por %p193, %p194
    %p197 = scmp.ne.s32.totalorder %s180, %s196
    %p198 = scmp.eq.s32.totalorder %s18, 0
    %p199 = por %p197, %p198
    %p200 = scmp.le.s32.totalorder 1, %s12
    %p201 = scmp.lt.s32.totalorder %s12, 7
    %p202 = pnand %p200, %p201
    %p203 = pneg %p202
    // Predicated region
    $region9: #{tpu_custom_call.1} parent=5 // pred_check
      _
    $region10: #{tpu_custom_call.1} parent=5 // pred_check_branch
      %205 = sbr.rel (%p202) target = $region12
    $region11: #{tpu_custom_call.1} parent=5 // pred_region
      %s206 = ssub.s32 %s12, 1
      // Predicated region
      $region13: #{tpu_custom_call.1} parent=11 // pred_check
        %p207 = pneg %p101
      $region14: #{tpu_custom_call.1} parent=11 // pred_check_branch
        %209 = sbr.rel (%p207) target = $region16
      $region15: #{tpu_custom_call.1} parent=11 // pred_region
        _
      $region16: #{tpu_custom_call.1} parent=11 // pred_fallthru
        _
      // Predicated region
      $region17: #{tpu_custom_call.1} parent=11 // pred_check
        %p210 = pneg %p122
      $region18: #{tpu_custom_call.1} parent=11 // pred_check_branch
        %212 = sbr.rel (%p210) target = $region20
      $region19: #{tpu_custom_call.1} parent=11 // pred_region
        _
      $region20: #{tpu_custom_call.1} parent=11 // pred_fallthru
        _
      // Predicated region
      $region21: #{tpu_custom_call.1} parent=11 // pred_check
        %p213 = pneg %p143
      $region22: #{tpu_custom_call.1} parent=11 // pred_check_branch
        %215 = sbr.rel (%p213) target = $region24
      $region23: #{tpu_custom_call.1} parent=11 // pred_region
        _
      $region24: #{tpu_custom_call.1} parent=11 // pred_fallthru
        _
      // Predicated region
      $region25: #{tpu_custom_call.1} parent=11 // pred_check
        %p216 = pneg %p164
      $region26: #{tpu_custom_call.1} parent=11 // pred_check_branch
        %218 = sbr.rel (%p216) target = $region28
      $region27: #{tpu_custom_call.1} parent=11 // pred_region
        _
      $region28: #{tpu_custom_call.1} parent=11 // pred_fallthru
        _
    $region12: #{tpu_custom_call.1} parent=5 // pred_fallthru
      _
    %p219 = scmp.lt.s32.totalorder %s12, 6
    // Predicated region
    $region29: #{tpu_custom_call.1} parent=5 // pred_check
      %p220 = pneg %p219
    $region30: #{tpu_custom_call.1} parent=5 // pred_check_branch
      %222 = sbr.rel (%p220) target = $region32
    $region31: #{tpu_custom_call.1} parent=5 // pred_region
      // Predicated region
      $region33: #{tpu_custom_call.1} parent=31 // pred_check
        %p223 = pneg %p46
      $region34: #{tpu_custom_call.1} parent=31 // pred_check_branch
        %225 = sbr.rel (%p223) target = $region36
      $region35: #{tpu_custom_call.1} parent=31 // pred_region
        %p226 = scmp.lt.s32.totalorder %s19, 1
        %s227 = scalar_select %p226, %s19, 1
        %p228 = scmp.lt.s32.totalorder %s20, 2
        %s229 = scalar_select %p228, %s20, 2
        %s230 = smul.addr %s229, 3
        %s231 = smul.addr %s227, 9
        %s232 = sadd.s32 %s230, %s231
        %s233 = smul.addr %s232, 4
        %s234 = scalar_lea.vmem %s0, %s233
      $region36: #{tpu_custom_call.1} parent=31 // pred_fallthru
        _
      // Predicated region
      $region37: #{tpu_custom_call.1} parent=31 // pred_check
        %p235 = pneg %p74
      $region38: #{tpu_custom_call.1} parent=31 // pred_check_branch
        %237 = sbr.rel (%p235) target = $region40
      $region39: #{tpu_custom_call.1} parent=31 // pred_region
        %p238 = scmp.lt.s32.totalorder %s19, 1
        %s239 = scalar_select %p238, %s19, 1
        %p240 = scmp.lt.s32.totalorder %s20, 2
        %s241 = scalar_select %p240, %s20, 2
        %s242 = smul.addr %s241, 3
        %s243 = smul.addr %s239, 9
        %s244 = sadd.s32 %s242, %s243
        %s245 = smul.addr %s244, 8
        %s246 = scalar_lea.vmem %s1, %s245
      $region40: #{tpu_custom_call.1} parent=31 // pred_fallthru
        _
    $region32: #{tpu_custom_call.1} parent=5 // pred_fallthru
      _
    %p247 = scmp.le.s32.totalorder 1, %s12
    %p248 = scmp.lt.s32.totalorder %s12, 7
    %p249 = pnand %p247, %p248
    %p250 = pneg %p249
    // Predicated region
    $region41: #{tpu_custom_call.1} parent=5 // pred_check
      _
    $region42: #{tpu_custom_call.1} parent=5 // pred_check_branch
      %252 = sbr.rel (%p249) target = $region44
    $region43: #{tpu_custom_call.1} parent=5 // pred_region
      %s253 = ssub.s32 %s12, 1
      %p254 = scmp.lt.s32.totalorder %s21, 1
      %s255 = scalar_select %p254, %s21, 1
      %p256 = scmp.lt.s32.totalorder %s22, 2
      %s257 = scalar_select %p256, %s22, 2
      %s258 = smul.addr %s257, 3
      %s259 = smul.addr %s255, 9
      %s260 = sadd.s32 %s258, %s259
      %s261 = smul.addr %s260, 4
      %s262 = scalar_lea.vmem %s0, %s261
      %p263 = pneg %p52
      %p264 = pneg %p49
      %p265 = scmp.lt.s32.totalorder %s21, 1
      %s266 = scalar_select %p265, %s21, 1
      %p267 = scmp.lt.s32.totalorder %s22, 2
      %s268 = scalar_select %p267, %s22, 2
      %s269 = smul.addr %s268, 3
      %s270 = smul.addr %s266, 9
      %s271 = sadd.s32 %s269, %s270
      %s272 = smul.addr %s271, 8
      %s273 = scalar_lea.vmem %s1, %s272
      %p274 = pneg %p80
      %p275 = pneg %p77
      %p276 = pneg %p101
      %p277 = pneg %p98
      %p278 = pneg %p122
      %p279 = pneg %p119
      %p280 = pneg %p143
      %p281 = pneg %p140
      %p282 = pneg %p164
      %p283 = pneg %p161
      %p284 = pneg %p192
      %p285 = pneg %p189
      %p286 = scmp.lt.s32.totalorder %s21, 1
      %s287 = scalar_select %p286, %s21, 1
      %p288 = scmp.lt.s32.totalorder %s22, 2
      %s289 = scalar_select %p288, %s22, 2
      %s290 = smul.addr %s289, 2
      %s291 = smul.addr %s287, 6
      %s292 = sadd.s32 %s290, %s291
      %s293 = smul.addr %s292, 8
      %s294 = scalar_lea.vmem %s6, %s293
      %p295 = scmp.lt.s32.totalorder %s21, 1
      %s296 = scalar_select %p295, %s21, 1
      %p297 = scmp.lt.s32.totalorder %s22, 2
      %s298 = scalar_select %p297, %s22, 2
      %s299 = smul.addr %s298, 3
      %s300 = smul.addr %s296, 9
      %s301 = sadd.s32 %s299, %s300
      %s302 = smul.addr %s301, 4
      %s303 = scalar_lea.vmem %s0, %s302
      %p304 = scmp.lt.s32.totalorder %s21, 1
      %s305 = scalar_select %p304, %s21, 1
      %p306 = scmp.lt.s32.totalorder %s22, 2
      %s307 = scalar_select %p306, %s22, 2
      %s308 = smul.addr %s307, 3
      %s309 = smul.addr %s305, 9
      %s310 = sadd.s32 %s308, %s309
      %s311 = smul.addr %s310, 8
      %s312 = scalar_lea.vmem %s1, %s311
      %p313 = scmp.lt.s32.totalorder %s21, 1
      %s314 = scalar_select %p313, %s21, 1
      %p315 = scmp.lt.s32.totalorder %s22, 2
      %s316 = scalar_select %p315, %s22, 2
      %s317 = smul.addr %s316, 2
      %s318 = smul.addr %s314, 6
      %s319 = sadd.s32 %s317, %s318
      %s320 = smul.addr %s319, 8
      %s321 = scalar_lea.vmem %s6, %s320
      %v323 = vld [vmem:[%s312] sm:$0xff]
      %v324 = vld [vmem:[%s312 + $0x8] sm:$0xff]
      %v325 = vld [vmem:[%s312 + $0x10] sm:$0xf]
      %v326 = vld [vmem:[%s303] sm:$0xf]
      %v327 = vld [vmem:[%s303 + $0x4] sm:$0xf]
      %v328 = vld [vmem:[%s303 + $0x8] sm:$0x3]
      %v329 = vpack.c.bf16 %v324, %v323
      %v330 = vpack.c.bf16 %v325, %v325
      %332 = vset.pattern.permute.xlu0 0
      %333 = vperm.xlu0 %332, %v329
      %v334 = vpop.permute.xlu0 %333
      %336 = vset.pattern.permute.xlu0 0
      %337 = vperm.xlu0 %336, %v330
      %v338 = vpop.permute.xlu0 %337
      %v342 = vunpack.c.l.s4 839922192
      %v343 = vunpack.c.0.s8 %v342
      %v344 = vlaneseq
      %v345 = vshrl.u32 %v344, 7
      %v346 = vsub.s32 %v343, %v345
      %v347 = vrot.slane %v334, %v346
      %v349 = vunpack.c.l.s4 1985246804
      %v350 = vunpack.c.0.s8 %v349
      %v351 = vlaneseq
      %v352 = vshrl.u32 %v351, 7
      %v353 = vsub.s32 %v350, %v352
      %v354 = vrot.slane %v334, %v353
      %v356 = vunpack.c.l.s4 839922192
      %v357 = vunpack.c.0.s8 %v356
      %v358 = vlaneseq
      %v359 = vshrl.u32 %v358, 7
      %v360 = vsub.s32 %v357, %v359
      %v361 = vrot.slane %v338, %v360
      %v365 = vmul.bf16 %v326, %v347
      %v366 = vmul.bf16 %v327, %v354
      %v367 = vmul.bf16 %v328, %v361
      %v371 = vunpack.c.l.b16 %v365
      %v372 = vunpack.c.l.b16 %v366
      %v373 = vunpack.c.l.b16 %v367
      %v374 = vpack.c.b16 %v372, %v371
      %v375 = vpack.c.b16 %v373, %v373
      %vm376 = vsmask.f32 7424
      %v378 = vshrl.u32 %v374, 16
      %v380 = vshll.u32 %v374, 16
      %v382 = vrot.slane %v380, 1
      %v383 = vor.u32 %v378, %v382
      %v385 = vshll.u32 %v375, 16
      %v387 = vrot.slane %v385, 1
      %v388 = vsel %vm376, %v383, %v387
      %v389 = vshrl.u32 %v375, 16
      %v391 = vor.u32 %v389, %v387
      %392 = vrot.lane.b32.xlu0 %v388, 8
      %v393 = vpop.permute.xlu0 %392
      %394 = vrot.lane.b32.xlu0 %v391, 8
      %v395 = vpop.permute.xlu0 %394
      %vm396 = vcmask 1046528
      %v397 = vrot.slane %v374, 1
      %v398 = vrot.slane %v375, 1
      %v399 = vsel %vm396, %v397, %v398
      %400 = vrot.lane.b32.xlu0 %v399, 16
      %v401 = vpop.permute.xlu0 %400
      %402 = vrot.lane.b32.xlu0 %v398, 16
      %v403 = vpop.permute.xlu0 %402
      %vm404 = vcmask 64512
      %v406 = vsel %vm404, %v374, %v393
      %v408 = vsel %vm404, %v375, %v395
      %vm409 = vcmask 130048
      %v411 = vsel %vm409, %v406, %v401
      %v413 = vsel %vm409, %v408, %v403
      %v414 = vld [vmem:[%s2] sm:$0xf]
      %v415 = vld [vmem:[%s2 + $0x4] sm:$0xf]
      %v416 = vld [vmem:[%s2 + $0x8] sm:$0xf]
      %v417 = vld [vmem:[%s3] sm:$0x1]
      %v419 = vlaneseq
      %v420 = vshrl.u32 %v419, 7
      %v421 = vsub.s32 0, %v420
      %v422 = vrot.slane %v417, %v421
      %v427 = vunpack.c.l.b16 %v414
      %v428 = vunpack.c.l.b16 %v415
      %v429 = vunpack.c.l.b16 %v416
      %v430 = vpack.c.b16 %v428, %v427
      %v431 = vpack.c.b16 %v429, %v429
      %vm433 = vcmask 195584
      %v434 = vsel %vm433, %v411, 0
      %v436 = vsel %vm433, %v413, 0
      %vm438 = vcmask 1043456
      %v440 = vsel %vm438, %v431, 0
      %442 = vmatprep.subr.bf16.mxu0 0
      %443 = vmatpush1.bf16.msra.mxu0 0
      %444 = vmatprep.subr.bf16.mxu0 0
      %445 = vmatpush1.bf16.msra.mxu0 0
      %446 = vmatprep.subr.bf16.mxu0 0
      %447 = vmatpush1.bf16.msra.mxu0 0
      %448 = vmatprep.subr.bf16.mxu0 0
      %449 = vmatpush1.bf16.msra.mxu0 0
      %450 = vmatprep.subr.bf16.mxu0 0
      %451 = vmatpush1.bf16.msra.mxu0 0
      %452 = vmatprep.subr.bf16.mxu0 0
      %453 = vmatpush1.bf16.msra.mxu0 0
      %454 = vmatprep.subr.bf16.mxu0 0
      %455 = vmatpush1.bf16.msra.mxu0 %v440
      %456 = vmatprep.subr.bf16.mxu0 0
      %457 = vmatpush1.bf16.msra.mxu0 %v430
      %458 = vmatprep.subr.bf16.mxu0 0
      %459 = vmatpush2.bf16.msra.mxu0 0
      %460 = vmatprep.subr.bf16.mxu0 0
      %461 = vmatpush2.bf16.msra.mxu0 0
      %462 = vmatprep.subr.bf16.mxu0 0
      %463 = vmatpush2.bf16.msra.mxu0 0
      %464 = vmatprep.subr.bf16.mxu0 0
      %465 = vmatpush2.bf16.msra.mxu0 0
      %466 = vmatprep.subr.bf16.mxu0 0
      %467 = vmatpush2.bf16.msra.mxu0 0
      %468 = vmatprep.subr.bf16.mxu0 0
      %469 = vmatpush2.bf16.msra.mxu0 0
      %470 = vmatprep.subr.bf16.mxu0 0
      %471 = vmatpush2.bf16.msra.mxu0 0
      %472 = vmatprep.subr.bf16.mxu0 0
      %473 = vmatpush2.bf16.msra.mxu0 0
      %474 = vmatprep.mubr.bf16.mxu0 0
      %475 = vmatmul.mubr.bf16.gmra.mxu0 %v434
      %v476 = vpop.f32.mrf.mxu0
      %v477 = vadd.f32 %v422, %v476
      %v478 = vpop.f32.mrf.mxu0
      %v479 = vpop.f32.mrf.mxu0
      %v480 = vadd.f32 %v422, %v479
      %v481 = vpop.f32.mrf.mxu0
      %482 = vmatprep.mubr.bf16.mxu0 0
      %483 = vmatmul.mubr.bf16.gmra.mxu0 %v436
      %v484 = vpop.f32.mrf.mxu0
      %v485 = vadd.f32 %v422, %v484
      %v486 = vpop.f32.mrf.mxu0
      %v487 = vpop.f32.mrf.mxu0
      %v488 = vpop.f32.mrf.mxu0
      %489 = vdwg.mxu0
      %v490 = vmax.f32 %v477, 0.0
      %v491 = vmax.f32 %v480, 0.0
      %v492 = vmax.f32 %v485, 0.0
      %494 = vset.pattern.permute.xlu0 0
      %495 = vperm.xlu0 %494, %v323
      %v496 = vpop.permute.xlu0 %495
      %498 = vset.pattern.permute.xlu0 0
      %499 = vperm.xlu0 %498, %v324
      %v500 = vpop.permute.xlu0 %499
      %502 = vset.pattern.permute.xlu0 0
      %503 = vperm.xlu0 %502, %v325
      %v504 = vpop.permute.xlu0 %503
      %vm505 = vcmask 1046528
      %v506 = vrot.slane %v496, 1
      %v507 = vrot.slane %v500, 1
      %v508 = vsel %vm505, %v506, %v507
      %v509 = vrot.slane %v504, 1
      %v510 = vsel %vm505, %v507, %v509
      %v514 = vmul.f32 %v490, %v508
      %v515 = vmul.f32 %v491, %v510
      %v516 = vmul.f32 %v492, %v509
      %v517 = vpack.c.bf16 %v515, %v514
      %v518 = vpack.c.bf16 %v516, %v516
      %v519 = vld [vmem:[%s4] sm:$0xf]
      %v520 = vld [vmem:[%s4 + $0x4] sm:$0xf]
      %v521 = vld [vmem:[%s4 + $0x8] sm:$0xf]
      %v522 = vld [vmem:[%s4 + $0xc] sm:$0xf]
      %s523 = scalar_lea.vmem %s4, 16
      %v524 = vld [vmem:[%s523] sm:$0xf]
      %v525 = vld [vmem:[%s523 + $0x4] sm:$0xf]
      %v526 = vld [vmem:[%s523 + $0x8] sm:$0xf]
      %v527 = vld [vmem:[%s523 + $0xc] sm:$0xf]
      %v529 = vshrl.u32 %v517, 16
      %v531 = vshll.u32 %v517, 16
      %v533 = vrot.slane %v531, 1
      %v534 = vor.u32 %v529, %v533
      %v536 = vshll.u32 %v518, 16
      %v538 = vrot.slane %v536, 1
      %v539 = vsel %vm376, %v534, %v538
      %v544 = vunpack.c.l.b16 %v524
      %v545 = vunpack.c.l.b16 %v525
      %v546 = vunpack.c.l.b16 %v526
      %v547 = vunpack.c.l.b16 %v527
      %v548 = vpack.c.b16 %v545, %v544
      %v549 = vpack.c.b16 %v547, %v546
      %vm552 = vcmask 261120
      %v554 = vsel %vm552, %v539, 0
      %556 = vmatprep.subr.bf16.mxu0 0
      %557 = vmatpush1.bf16.msra.mxu0 0
      %558 = vmatprep.subr.bf16.mxu0 0
      %559 = vmatpush1.bf16.msra.mxu0 0
      %560 = vmatprep.subr.bf16.mxu0 0
      %561 = vmatpush1.bf16.msra.mxu0 0
      %562 = vmatprep.subr.bf16.mxu0 0
      %563 = vmatpush1.bf16.msra.mxu0 0
      %564 = vmatprep.subr.bf16.mxu0 0
      %565 = vmatpush1.bf16.msra.mxu0 0
      %566 = vmatprep.subr.bf16.mxu0 0
      %567 = vmatpush1.bf16.msra.mxu0 0
      %568 = vmatprep.subr.bf16.mxu0 0
      %569 = vmatpush1.bf16.msra.mxu0 %v549
      %570 = vmatprep.subr.bf16.mxu0 0
      %571 = vmatpush1.bf16.msra.mxu0 %v548
      %572 = vmatprep.subr.bf16.mxu0 0
      %573 = vmatpush2.bf16.msra.mxu0 0
      %574 = vmatprep.subr.bf16.mxu0 0
      %575 = vmatpush2.bf16.msra.mxu0 0
      %576 = vmatprep.subr.bf16.mxu0 0
      %577 = vmatpush2.bf16.msra.mxu0 0
      %578 = vmatprep.subr.bf16.mxu0 0
      %579 = vmatpush2.bf16.msra.mxu0 0
      %580 = vmatprep.subr.bf16.mxu0 0
      %581 = vmatpush2.bf16.msra.mxu0 0
      %582 = vmatprep.subr.bf16.mxu0 0
      %583 = vmatpush2.bf16.msra.mxu0 0
      %584 = vmatprep.subr.bf16.mxu0 0
      %585 = vmatpush2.bf16.msra.mxu0 0
      %586 = vmatprep.subr.bf16.mxu0 0
      %587 = vmatpush2.bf16.msra.mxu0 0
      %588 = vmatprep.mubr.bf16.mxu0 0
      %589 = vmatmul.mubr.bf16.gmra.mxu0 %v554
      %v590 = vpop.f32.mrf.mxu0
      %v591 = vadd.f32 0.0, %v590
      %v592 = vpop.f32.mrf.mxu0
      %v593 = vpop.f32.mrf.mxu0
      %v594 = vadd.f32 0.0, %v593
      %v595 = vpop.f32.mrf.mxu0
      %596 = vdwg.mxu0
      %v601 = vunpack.c.l.b16 %v519
      %v602 = vunpack.c.l.b16 %v520
      %v603 = vunpack.c.l.b16 %v521
      %v604 = vunpack.c.l.b16 %v522
      %v605 = vpack.c.b16 %v602, %v601
      %v606 = vpack.c.b16 %v604, %v603
      %v609 = vsel %vm552, %v517, 0
      %611 = vmatprep.subr.bf16.mxu0 0
      %612 = vmatpush1.bf16.msra.mxu0 0
      %613 = vmatprep.subr.bf16.mxu0 0
      %614 = vmatpush1.bf16.msra.mxu0 0
      %615 = vmatprep.subr.bf16.mxu0 0
      %616 = vmatpush1.bf16.msra.mxu0 0
      %617 = vmatprep.subr.bf16.mxu0 0
      %618 = vmatpush1.bf16.msra.mxu0 0
      %619 = vmatprep.subr.bf16.mxu0 0
      %620 = vmatpush1.bf16.msra.mxu0 0
      %621 = vmatprep.subr.bf16.mxu0 0
      %622 = vmatpush1.bf16.msra.mxu0 0
      %623 = vmatprep.subr.bf16.mxu0 0
      %624 = vmatpush1.bf16.msra.mxu0 %v606
      %625 = vmatprep.subr.bf16.mxu0 0
      %626 = vmatpush1.bf16.msra.mxu0 %v605
      %627 = vmatprep.subr.bf16.mxu0 0
      %628 = vmatpush2.bf16.msra.mxu0 0
      %629 = vmatprep.subr.bf16.mxu0 0
      %630 = vmatpush2.bf16.msra.mxu0 0
      %631 = vmatprep.subr.bf16.mxu0 0
      %632 = vmatpush2.bf16.msra.mxu0 0
      %633 = vmatprep.subr.bf16.mxu0 0
      %634 = vmatpush2.bf16.msra.mxu0 0
      %635 = vmatprep.subr.bf16.mxu0 0
      %636 = vmatpush2.bf16.msra.mxu0 0
      %637 = vmatprep.subr.bf16.mxu0 0
      %638 = vmatpush2.bf16.msra.mxu0 0
      %639 = vmatprep.subr.bf16.mxu0 0
      %640 = vmatpush2.bf16.msra.mxu0 0
      %641 = vmatprep.subr.bf16.mxu0 0
      %642 = vmatpush2.bf16.msra.mxu0 0
      %643 = vmatprep.mubr.bf16.mxu0 0
      %644 = vmatmul.mubr.bf16.gmra.mxu0 %v609
      %v645 = vpop.f32.mrf.mxu0
      %v646 = vadd.f32 %v591, %v645
      %v647 = vpop.f32.mrf.mxu0
      %v648 = vpop.f32.mrf.mxu0
      %v649 = vadd.f32 %v594, %v648
      %v650 = vpop.f32.mrf.mxu0
      %651 = vdwg.mxu0
      %s652 = scalar_lea.vmem %s4, 32
      %v653 = vld [vmem:[%s652] sm:$0xf]
      %v654 = vld [vmem:[%s652 + $0x4] sm:$0xf]
      %v655 = vld [vmem:[%s652 + $0x8] sm:$0xf]
      %v656 = vld [vmem:[%s652 + $0xc] sm:$0xf]
      %v659 = vrot.slane %v517, 1
      %v660 = vrot.slane %v518, 1
      %v661 = vsel %vm396, %v659, %v660
      %v666 = vunpack.c.l.b16 %v653
      %v667 = vunpack.c.l.b16 %v654
      %v668 = vunpack.c.l.b16 %v655
      %v669 = vunpack.c.l.b16 %v656
      %v670 = vpack.c.b16 %v667, %v666
      %v671 = vpack.c.b16 %v669, %v668
      %v675 = vsel %vm552, %v661, 0
      %677 = vmatprep.subr.bf16.mxu0 0
      %678 = vmatpush1.bf16.msra.mxu0 0
      %679 = vmatprep.subr.bf16.mxu0 0
      %680 = vmatpush1.bf16.msra.mxu0 0
      %681 = vmatprep.subr.bf16.mxu0 0
      %682 = vmatpush1.bf16.msra.mxu0 0
      %683 = vmatprep.subr.bf16.mxu0 0
      %684 = vmatpush1.bf16.msra.mxu0 0
      %685 = vmatprep.subr.bf16.mxu0 0
      %686 = vmatpush1.bf16.msra.mxu0 0
      %687 = vmatprep.subr.bf16.mxu0 0
      %688 = vmatpush1.bf16.msra.mxu0 0
      %689 = vmatprep.subr.bf16.mxu0 0
      %690 = vmatpush1.bf16.msra.mxu0 %v671
      %691 = vmatprep.subr.bf16.mxu0 0
      %692 = vmatpush1.bf16.msra.mxu0 %v670
      %693 = vmatprep.subr.bf16.mxu0 0
      %694 = vmatpush2.bf16.msra.mxu0 0
      %695 = vmatprep.subr.bf16.mxu0 0
      %696 = vmatpush2.bf16.msra.mxu0 0
      %697 = vmatprep.subr.bf16.mxu0 0
      %698 = vmatpush2.bf16.msra.mxu0 0
      %699 = vmatprep.subr.bf16.mxu0 0
      %700 = vmatpush2.bf16.msra.mxu0 0
      %701 = vmatprep.subr.bf16.mxu0 0
      %702 = vmatpush2.bf16.msra.mxu0 0
      %703 = vmatprep.subr.bf16.mxu0 0
      %704 = vmatpush2.bf16.msra.mxu0 0
      %705 = vmatprep.subr.bf16.mxu0 0
      %706 = vmatpush2.bf16.msra.mxu0 0
      %707 = vmatprep.subr.bf16.mxu0 0
      %708 = vmatpush2.bf16.msra.mxu0 0
      %709 = vmatprep.mubr.bf16.mxu0 0
      %710 = vmatmul.mubr.bf16.gmra.mxu0 %v675
      %v711 = vpop.f32.mrf.mxu0
      %v712 = vadd.f32 0.0, %v711
      %v713 = vpop.f32.mrf.mxu0
      %v714 = vpop.f32.mrf.mxu0
      %v715 = vadd.f32 0.0, %v714
      %v716 = vpop.f32.mrf.mxu0
      %717 = vdwg.mxu0
      %v718 = vadd.f32 %v646, %v712
      %v719 = vadd.f32 %v649, %v715
      %v720 = vld [vmem:[%s5] sm:$0x1]
      %v722 = vlaneseq
      %v723 = vshrl.u32 %v722, 7
      %v724 = vsub.s32 0, %v723
      %v725 = vrot.slane %v720, %v724
      %v727 = vadd.f32 %v718, %v725
      %v728 = vadd.f32 %v719, %v725
      %vm729 = vcmask 1045504
      %v730 = vrot.slane %v496, 2
      %v731 = vrot.slane %v500, 2
      %v732 = vsel %vm729, %v730, %v731
      %v733 = vrot.slane %v504, 2
      %v734 = vsel %vm729, %v731, %v733
      %v737 = vmul.f32 %v727, %v732
      %v738 = vmul.f32 %v728, %v734
      %739 = vst.msk [vmem:[%s321] sm:$0xff] %vm404, %v737
      %740 = vst.msk [vmem:[%s321 + $0x8] sm:$0xff] %vm404, %v738
      %p741 = scmp.lt.s32.totalorder %s21, 1
      %s742 = scalar_select %p741, %s21, 1
      %p743 = scmp.lt.s32.totalorder %s22, 2
      %s744 = scalar_select %p743, %s22, 2
      %s745 = smul.addr %s744, 2
      %s746 = smul.addr %s742, 6
      %s747 = sadd.s32 %s745, %s746
      %s748 = smul.addr %s747, 8
      %s749 = scalar_lea.vmem %s6, %s748
      // Predicated region
      $region45: #{tpu_custom_call.1} parent=43 // pred_check
        %p750 = pneg %p189
      $region46: #{tpu_custom_call.1} parent=43 // pred_check_branch
        %752 = sbr.rel (%p750) target = $region48
      $region47: #{tpu_custom_call.1} parent=43 // pred_region
        _
      $region48: #{tpu_custom_call.1} parent=43 // pred_fallthru
        _
    $region44: #{tpu_custom_call.1} parent=5 // pred_fallthru
      _
    %p753 = scmp.le.s32.totalorder 2, %s12
    // Predicated region
    $region49: #{tpu_custom_call.1} parent=5 // pred_check
      %p754 = pneg %p753
    $region50: #{tpu_custom_call.1} parent=5 // pred_check_branch
      %756 = sbr.rel (%p754) target = $region52
    $region51: #{tpu_custom_call.1} parent=5 // pred_region
      %s757 = ssub.s32 %s12, 2
      // Predicated region
      $region53: #{tpu_custom_call.1} parent=51 // pred_check
        %p758 = pneg %p195
      $region54: #{tpu_custom_call.1} parent=51 // pred_check_branch
        %760 = sbr.rel (%p758) target = $region56
      $region55: #{tpu_custom_call.1} parent=51 // pred_region
        %p761 = scmp.lt.s32.totalorder %s23, 1
        %s762 = scalar_select %p761, %s23, 1
        %p763 = scmp.lt.s32.totalorder %s24, 2
        %s764 = scalar_select %p763, %s24, 2
        %s765 = smul.addr %s764, 2
        %s766 = smul.addr %s762, 6
        %s767 = sadd.s32 %s765, %s766
        %s768 = smul.addr %s767, 8
        %s769 = scalar_lea.vmem %s6, %s768
      $region56: #{tpu_custom_call.1} parent=51 // pred_fallthru
        _
    $region52: #{tpu_custom_call.1} parent=5 // pred_fallthru
      _
  $region6: #{tpu_custom_call.1} parent=0 // loop_footer
    %s16 = sadd.s32 1, %s12
  $region7: #{tpu_custom_call.1} parent=0 // loop_footer_branch
    %11 = sbr.rel target = $region3
  $region8: #{tpu_custom_call.1} parent=0 // loop_exit
    _

</llo_original>
